<compile_context>
chip_gen: v7x
topology: tpu7x:2x2x1
jax: 0.10.0
libtpu: 0.0.40
codegen_flags: <defaults>
</compile_context>

<pallas_src>
import jax
import jax.numpy as jnp
from jax.experimental import pallas as pl
from jax.experimental.pallas import tpu as pltpu

HIDDEN = 100        # logical hidden width of the torch module
HIDDEN_PAD = 128    # lane-aligned padded hidden width


def _round_up(x, m):
    return (x + m - 1) // m * m


def _pad_k(in_dim):
    # Layer-1 K dim: lane-multiple when large, sublane-multiple when small
    # (padding a tiny K to 128 would only inflate the x HBM stream).
    if in_dim % 128 == 0:
        return in_dim
    if in_dim > 128:
        return _round_up(in_dim, 128)
    return _round_up(in_dim, 8)


def _choose_tile_m(batch, in_dim_pad):
    """Batch tile: as large as comfortably fits a conservative VMEM budget,
    a multiple of 128 when the grid is tiled (lane-dense output stays
    unmasked), and >= 2 blocks for bigger batches so v7x's two TensorCores
    both get work."""
    if batch <= 256:
        return _round_up(batch, 8)          # single tile, full extent
    budget = 16 * 1024 * 1024               # streamed data; weights add ~0.2 MiB
    # per row: double-buffered bf16 x + double-buffered f32 out + f32 h1/h2
    per_row = 2 * in_dim_pad * 2 + 2 * 4 + 2 * HIDDEN_PAD * 4
    cap = min(4096, max(128, (budget // per_row) // 128 * 128))
    half = _round_up(-(-batch // 2), 128)   # aim for >= 2 grid blocks
    return max(128, min(cap, half))


def ffn_kernel(x_ref, w1_ref, b1_ref, w2_ref, b2_ref, w3_ref, b3_ref, o_ref):
    # Layer 1: bf16 MXU operands, f32 accumulation; bias + ReLU in f32.
    h1 = jnp.dot(x_ref[...], w1_ref[...], preferred_element_type=jnp.float32)
    h1 = jnp.maximum(h1 + b1_ref[...], 0.0)
    # Layer 2: cast the activation to bf16 only at the dot operand.
    h2 = jnp.dot(h1.astype(jnp.bfloat16), w2_ref[...],
                 preferred_element_type=jnp.float32)
    h2 = jnp.maximum(h2 + b2_ref[...], 0.0)
    # Layer 3: N=1 output -> f32 VPU multiply + cross-lane reduce (XLU) instead
    # of a single-column MXU pass; scalar bias comes from SMEM.  The result is
    # stored lane-dense as a (1, tile_m) row.
    out = jnp.sum(h2 * w3_ref[...], axis=-1) + b3_ref[0]     # (tile_m,)
    o_ref[...] = out.reshape(o_ref.shape).astype(o_ref.dtype)


def prepare_params(w1, b1, w2, b2, w3, b3):
    """One-time parameter prep (off the hot path): pad hidden 100 -> 128 and
    K -> aligned, cast matmul weights to bf16, keep bias / VPU weights in f32."""
    in_dim = w1.shape[0]
    kp = _pad_k(in_dim) - in_dim
    hp = HIDDEN_PAD - w1.shape[1]
    w1p = jnp.pad(w1, ((0, kp), (0, hp))).astype(jnp.bfloat16)
    b1p = jnp.pad(b1.reshape(1, -1), ((0, 0), (0, hp))).astype(jnp.float32)
    w2p = jnp.pad(w2, ((0, hp), (0, hp))).astype(jnp.bfloat16)
    b2p = jnp.pad(b2.reshape(1, -1), ((0, 0), (0, hp))).astype(jnp.float32)
    w3p = jnp.pad(w3.reshape(1, -1), ((0, 0), (0, hp))).astype(jnp.float32)
    b3p = b3.reshape((1,)).astype(jnp.float32)
    return w1p, b1p, w2p, b2p, w3p, b3p


@jax.jit
def ffn_forward(x, params):
    w1p, b1p, w2p, b2p, w3p, b3p = params
    batch, in_dim = x.shape
    in_dim_pad = w1p.shape[0]

    tile_m = _choose_tile_m(batch, in_dim_pad)
    padded_batch = _round_up(batch, tile_m)
    num_blocks = padded_batch // tile_m

    # Hot-path data prep: pad rows / K and cast the x stream to bf16
    # (halves HBM traffic; padded rows are inert and sliced off below).
    xp = jnp.pad(x, ((0, padded_batch - batch), (0, in_dim_pad - in_dim)))
    xp = xp.astype(jnp.bfloat16)

    flops = 2 * padded_batch * (in_dim_pad * HIDDEN_PAD
                                + HIDDEN_PAD * HIDDEN_PAD + HIDDEN_PAD)
    bytes_accessed = (xp.size * 2 + padded_batch * 4
                      + (w1p.size + w2p.size) * 2
                      + (b1p.size + b2p.size + w3p.size + b3p.size) * 4)

    out = pl.pallas_call(
        ffn_kernel,
        out_shape=jax.ShapeDtypeStruct((1, padded_batch), jnp.float32),
        grid=(num_blocks,),
        in_specs=[
            pl.BlockSpec((tile_m, in_dim_pad), lambda i: (i, 0)),       # x stream
            pl.BlockSpec((in_dim_pad, HIDDEN_PAD), lambda i: (0, 0)),   # w1 (resident)
            pl.BlockSpec((1, HIDDEN_PAD), lambda i: (0, 0)),            # b1
            pl.BlockSpec((HIDDEN_PAD, HIDDEN_PAD), lambda i: (0, 0)),   # w2
            pl.BlockSpec((1, HIDDEN_PAD), lambda i: (0, 0)),            # b2
            pl.BlockSpec((1, HIDDEN_PAD), lambda i: (0, 0)),            # w3 row (f32)
            pl.BlockSpec(memory_space=pltpu.MemorySpace.SMEM),          # b3 scalar
        ],
        out_specs=pl.BlockSpec((1, tile_m), lambda i: (0, i)),          # lane-dense row
        compiler_params=pltpu.CompilerParams(
            dimension_semantics=("parallel",),
            vmem_limit_bytes=32 * 1024 * 1024),
        cost_estimate=pl.CostEstimate(flops=flops, transcendentals=0,
                                      bytes_accessed=bytes_accessed),
    )(xp, w1p, b1p, w2p, b2p, w3p, b3p)

    return out[0, :batch].reshape(batch, 1)


if __name__ == "__main__":
    key = jax.random.PRNGKey(0)
    kx, kp = jax.random.split(key)

    batch, in_dim = 8, 32
    x = jax.random.normal(kx, (batch, in_dim), jnp.float32)

    # Deterministic synthetic parameters matching the torch module's shapes:
    #   l1: Linear(in_dim, 100), l2: Linear(100, 100), l3: Linear(100, 1)
    k1, k2, k3, k4, k5, k6 = jax.random.split(kp, 6)
    w1 = jax.random.normal(k1, (in_dim, HIDDEN), jnp.float32) / jnp.sqrt(in_dim)
    b1 = jax.random.normal(k2, (HIDDEN,), jnp.float32) * 0.01
    w2 = jax.random.normal(k3, (HIDDEN, HIDDEN), jnp.float32) * 0.1
    b2 = jax.random.normal(k4, (HIDDEN,), jnp.float32) * 0.01
    w3 = jax.random.normal(k5, (HIDDEN, 1), jnp.float32) * 0.1
    b3 = jax.random.normal(k6, (1,), jnp.float32) * 0.01

    params = jax.block_until_ready(prepare_params(w1, b1, w2, b2, w3, b3))

    out = jax.block_until_ready(ffn_forward(x, params))

    # Pure-f32 reference (the torch module's forward semantics).  The kernel
    # uses bf16 MXU operands with f32 accumulation, so tolerance is loosened.
    ref = jnp.maximum(x @ w1 + b1, 0.0)
    ref = jnp.maximum(ref @ w2 + b2, 0.0)
    ref = ref @ w3 + b3
    assert out.shape == (batch, 1)
    max_err = float(jnp.abs(out - ref).max())
    assert jnp.allclose(out, ref, atol=5e-2, rtol=5e-2), max_err

    print("KERNEL_OK")
</pallas_src>

<mosaic_0001>
module attributes {stable_mosaic.version = 11 : i64} {
  func.func @ffn_kernel(%arg0: i32, %arg1: memref<8x32xbf16, #tpu.memory_space<vmem>>, %arg2: memref<32x128xbf16, #tpu.memory_space<vmem>>, %arg3: memref<1x128xf32, #tpu.memory_space<vmem>>, %arg4: memref<128x128xbf16, #tpu.memory_space<vmem>>, %arg5: memref<1x128xf32, #tpu.memory_space<vmem>>, %arg6: memref<1x128xf32, #tpu.memory_space<vmem>>, %arg7: memref<1xf32, #tpu.memory_space<smem>>, %arg8: memref<1x8xf32, #tpu.memory_space<vmem>>) attributes {dimension_semantics = [#tpu.dimension_semantics<parallel>], iteration_bounds = array<i64: 1>, scalar_prefetch = 0 : i64, scratch_operands = 0 : i64, tpu.core_type = #tpu.core_type<tc>, window_params = [{transform_indices = @transform_0, window_bounds = array<i64: 8, 32>}, {pipeline_mode = #tpu.pipeline_mode<synchronous>, transform_indices = @transform_1, window_bounds = array<i64: 32, 128>}, {pipeline_mode = #tpu.pipeline_mode<synchronous>, transform_indices = @transform_2, window_bounds = array<i64: 1, 128>}, {pipeline_mode = #tpu.pipeline_mode<synchronous>, transform_indices = @transform_3, window_bounds = array<i64: 128, 128>}, {pipeline_mode = #tpu.pipeline_mode<synchronous>, transform_indices = @transform_4, window_bounds = array<i64: 1, 128>}, {pipeline_mode = #tpu.pipeline_mode<synchronous>, transform_indices = @transform_5, window_bounds = array<i64: 1, 128>}, {transform_indices = @transform_6, window_bounds = array<i64: 1>}, {transform_indices = @transform_7, window_bounds = array<i64: 1, 8>}]} {
    %c0 = arith.constant 0 : index
    %c0_0 = arith.constant 0 : index
    %0 = vector.load %arg1[%c0, %c0_0] : memref<8x32xbf16, #tpu.memory_space<vmem>>, vector<8x32xbf16>
    %c0_1 = arith.constant 0 : index
    %c0_2 = arith.constant 0 : index
    %1 = vector.load %arg2[%c0_1, %c0_2] : memref<32x128xbf16, #tpu.memory_space<vmem>>, vector<32x128xbf16>
    %cst = arith.constant dense<0.000000e+00> : vector<8x128xf32>
    %2 = tpu.matmul %0, %1, %cst {dimension_numbers = #tpu.dot_dimension_numbers<[1], [0], [0], [1], [0, 0, 1, 1], [], []>} : vector<8x32xbf16>, vector<32x128xbf16>, vector<8x128xf32> -> vector<8x128xf32>
    %c0_3 = arith.constant 0 : index
    %c0_4 = arith.constant 0 : index
    %3 = vector.load %arg3[%c0_3, %c0_4] : memref<1x128xf32, #tpu.memory_space<vmem>>, vector<1x128xf32>
    %4 = vector.broadcast %3 : vector<1x128xf32> to vector<8x128xf32>
    %5 = arith.addf %2, %4 : vector<8x128xf32>
    %cst_5 = arith.constant 0.000000e+00 : f32
    %6 = vector.broadcast %cst_5 : f32 to vector<8x128xf32>
    %7 = arith.maximumf %5, %6 : vector<8x128xf32>
    %8 = arith.truncf %7 : vector<8x128xf32> to vector<8x128xbf16>
    %c0_6 = arith.constant 0 : index
    %c0_7 = arith.constant 0 : index
    %9 = vector.load %arg4[%c0_6, %c0_7] : memref<128x128xbf16, #tpu.memory_space<vmem>>, vector<128x128xbf16>
    %cst_8 = arith.constant dense<0.000000e+00> : vector<8x128xf32>
    %10 = tpu.matmul %8, %9, %cst_8 {dimension_numbers = #tpu.dot_dimension_numbers<[1], [0], [0], [1], [0, 0, 1, 1], [], []>} : vector<8x128xbf16>, vector<128x128xbf16>, vector<8x128xf32> -> vector<8x128xf32>
    %c0_9 = arith.constant 0 : index
    %c0_10 = arith.constant 0 : index
    %11 = vector.load %arg5[%c0_9, %c0_10] : memref<1x128xf32, #tpu.memory_space<vmem>>, vector<1x128xf32>
    %12 = vector.broadcast %11 : vector<1x128xf32> to vector<8x128xf32>
    %13 = arith.addf %10, %12 : vector<8x128xf32>
    %cst_11 = arith.constant 0.000000e+00 : f32
    %14 = vector.broadcast %cst_11 : f32 to vector<8x128xf32>
    %15 = arith.maximumf %13, %14 : vector<8x128xf32>
    %c0_12 = arith.constant 0 : index
    %c0_13 = arith.constant 0 : index
    %16 = vector.load %arg6[%c0_12, %c0_13] : memref<1x128xf32, #tpu.memory_space<vmem>>, vector<1x128xf32>
    %17 = vector.broadcast %16 : vector<1x128xf32> to vector<8x128xf32>
    %18 = arith.mulf %15, %17 : vector<8x128xf32>
    %cst_14 = arith.constant dense<0.000000e+00> : vector<8xf32>
    %19 = vector.multi_reduction <add>, %18, %cst_14 [1] : vector<8x128xf32> to vector<8xf32>
    %c0_15 = arith.constant 0 : index
    %20 = memref.load %arg7[%c0_15] : memref<1xf32, #tpu.memory_space<smem>>
    %21 = vector.broadcast %20 : f32 to vector<8xf32>
    %22 = arith.addf %19, %21 : vector<8xf32>
    %23 = vector.shape_cast %22 : vector<8xf32> to vector<1x8xf32>
    %c0_16 = arith.constant 0 : index
    %c0_17 = arith.constant 0 : index
    %24 = vector.load %arg8[%c0_16, %c0_17] : memref<1x8xf32, #tpu.memory_space<vmem>>, vector<1x8xf32>
    tpu.vector_store %arg8[%c0_16, %c0_17], %23 {strides = array<i32>} : memref<1x8xf32, #tpu.memory_space<vmem>>, vector<1x8xf32>,
    return
  }
  func.func @transform_0(%arg0: i32) -> (i32, i32) {
    %c0_i32 = arith.constant 0 : i32
    %c0_i32_0 = arith.constant 0 : i32
    return %arg0, %c0_i32 : i32, i32
  }
  func.func @transform_1(%arg0: i32) -> (i32, i32) {
    %c0_i32 = arith.constant 0 : i32
    %c0_i32_0 = arith.constant 0 : i32
    %c0_i32_1 = arith.constant 0 : i32
    return %c0_i32, %c0_i32_0 : i32, i32
  }
  func.func @transform_2(%arg0: i32) -> (i32, i32) {
    %c0_i32 = arith.constant 0 : i32
    %c0_i32_0 = arith.constant 0 : i32
    %c0_i32_1 = arith.constant 0 : i32
    return %c0_i32, %c0_i32_0 : i32, i32
  }
  func.func @transform_3(%arg0: i32) -> (i32, i32) {
    %c0_i32 = arith.constant 0 : i32
    %c0_i32_0 = arith.constant 0 : i32
    %c0_i32_1 = arith.constant 0 : i32
    return %c0_i32, %c0_i32_0 : i32, i32
  }
  func.func @transform_4(%arg0: i32) -> (i32, i32) {
    %c0_i32 = arith.constant 0 : i32
    %c0_i32_0 = arith.constant 0 : i32
    %c0_i32_1 = arith.constant 0 : i32
    return %c0_i32, %c0_i32_0 : i32, i32
  }
  func.func @transform_5(%arg0: i32) -> (i32, i32) {
    %c0_i32 = arith.constant 0 : i32
    %c0_i32_0 = arith.constant 0 : i32
    %c0_i32_1 = arith.constant 0 : i32
    return %c0_i32, %c0_i32_0 : i32, i32
  }
  func.func @transform_6(%arg0: i32) -> i32 {
    %c0_i32 = arith.constant 0 : i32
    %c0_i32_0 = arith.constant 0 : i32
    return %c0_i32 : i32
  }
  func.func @transform_7(%arg0: i32) -> (i32, i32) {
    %c0_i32 = arith.constant 0 : i32
    %c0_i32_0 = arith.constant 0 : i32
    return %c0_i32, %arg0 : i32, i32
  }
}

</mosaic_0001>

<llo_original>
// kernel: ffn_forward.1
$region0: #{ffn_forward.1}
  #allocation0 [shape = 'u32[]', space=smem, size = 0x4, offset = 0x4, fixed_abs, tag = 'smem constant byte address 0x4 - core index']
  #allocation1 [shape = 'u32[144,128]{1,0:T(1,128)}', space=vmem, size = 0x12000, scoped, tag = 'internal scratch']
  #allocation2 [shape = 'f32[1]{0:T(128)S(6)}', space=smem, size = 0x200, scoped, tag = 'scoped memory for ffn_forward.1']
  %s0 = inlined_call_operand.vmem [shape: bf16[8,32], index: 0, kind: input, shape index: {}]
  %s1 = inlined_call_operand.vmem [shape: bf16[32,128], index: 1, kind: input, shape index: {}]
  %s2 = inlined_call_operand.vmem [shape: f32[1,128], index: 2, kind: input, shape index: {}]
  %s3 = inlined_call_operand.hbm [shape: bf16[128,128], index: 3, kind: input, shape index: {}]
  %s4 = inlined_call_operand.vmem [shape: f32[1,128], index: 4, kind: input, shape index: {}]
  %s5 = inlined_call_operand.vmem [shape: f32[1,128], index: 5, kind: input, shape index: {}]
  %s6 = inlined_call_operand.<no memory space> [shape: f32[1], index: 6, kind: input, shape index: {}]
  %s7 = inlined_call_operand.hbm [shape: f32[1,8], index: 7, kind: output, shape index: {}]
  %s8 = sld [smem:[#allocation0]]
  $region42: #{ffn_forward.1} parent=0
    _
  %s10 = ssub.s32 1, %s8
  %s11 = scalar_select 0, %s10, %s8
  %12 = sst [smem:[#allocation2]] %s6
  $region1: #{ffn_forward.1} parent=0
    #allocation3 [shape = 'u8[32768]{0}', space=vmem, size = 0x8000, scoped, tag = 'input window, operand 3, single buffered']
    #allocation4 [shape = 's32[1]{0}', space=sflag, size = 0x4, scoped, tag = 'scoped memory for ffn_forward.1']
    #allocation5 [shape = 's32[1]{0}', space=sflag, size = 0x4, scoped, tag = 'scoped memory for ffn_forward.1']
    #allocation6 [shape = 'u8[512]{0}', space=vmem, size = 0x400, scoped, tag = 'output window, operand 0, single buffered']
    %13 = vsyncpa [#allocation4], 0
    %14 = vsyncpa [#allocation5], 0
    // Predicated region
    $region2: #{ffn_forward.1} parent=1 // pred_check
      _
    $region3: #{ffn_forward.1} parent=1 // pred_check_branch
      %16 = sbr.rel (0) target = $region5
    $region4: #{ffn_forward.1} parent=1 // pred_region
      _
    $region5: #{ffn_forward.1} parent=1 // pred_fallthru
      _
    // Predicated region
    $region6: #{ffn_forward.1} parent=1 // pred_check
      _
    $region7: #{ffn_forward.1} parent=1 // pred_check_branch
      %18 = sbr.rel (0) target = $region9
    $region8: #{ffn_forward.1} parent=1 // pred_region
      _
    $region9: #{ffn_forward.1} parent=1 // pred_fallthru
      _
    // Predicated region
    $region10: #{ffn_forward.1} parent=1 // pred_check
      _
    $region11: #{ffn_forward.1} parent=1 // pred_check_branch
      %20 = sbr.rel (0) target = $region13
    $region12: #{ffn_forward.1} parent=1 // pred_region
      _
    $region13: #{ffn_forward.1} parent=1 // pred_fallthru
      _
    // Predicated region
    $region14: #{ffn_forward.1} parent=1 // pred_check
      _
    $region15: #{ffn_forward.1} parent=1 // pred_check_branch
      %22 = sbr.rel (0) target = $region17
    $region16: #{ffn_forward.1} parent=1 // pred_region
      %s24 = ssub.s32 1024, 1024
      %25 = vsyncadd [#allocation4], %s24
      %s26 = sshll.u32 [#allocation3], 4
      %s27 = int_to_ptr.vmem [resolvable:$true] %s26
      %32 = dma.hbm_to_vmem [thread:$0]  %s3, 1024, %s27, [#allocation4], 64, 64, 4
    $region17: #{ffn_forward.1} parent=1 // pred_fallthru
      _
    // Predicated region
    $region18: #{ffn_forward.1} parent=1 // pred_check
      _
    $region19: #{ffn_forward.1} parent=1 // pred_check_branch
      %34 = sbr.rel (0) target = $region21
    $region20: #{ffn_forward.1} parent=1 // pred_region
      _
    $region21: #{ffn_forward.1} parent=1 // pred_fallthru
      _
    // Predicated region
    $region22: #{ffn_forward.1} parent=1 // pred_check
      _
    $region23: #{ffn_forward.1} parent=1 // pred_check_branch
      %36 = sbr.rel (0) target = $region25
    $region24: #{ffn_forward.1} parent=1 // pred_region
      _
    $region25: #{ffn_forward.1} parent=1 // pred_fallthru
      _
    // Predicated region
    $region26: #{ffn_forward.1} parent=1 // pred_check
      _
    $region27: #{ffn_forward.1} parent=1 // pred_check_branch
      %38 = sbr.rel (0) target = $region29
    $region28: #{ffn_forward.1} parent=1 // pred_region
      _
    $region29: #{ffn_forward.1} parent=1 // pred_fallthru
      _
    // Predicated region
    $region30: #{ffn_forward.1} parent=1 // pred_check
      _
    $region31: #{ffn_forward.1} parent=1 // pred_check_branch
      %40 = sbr.rel (0) target = $region33
    $region32: #{ffn_forward.1} parent=1 // pred_region
      %41 = dma.done [#allocation4], 1024
    $region33: #{ffn_forward.1} parent=1 // pred_fallthru
      _
    %v43 = vld [vmem:[%s0] sm:$0xf]
    %v44 = vld [vmem:[%s1] sm:$0xf]
    %v45 = vld [vmem:[%s1 + $0x4] sm:$0xf]
    %v46 = vld [vmem:[%s1 + $0x8] sm:$0xf]
    %v47 = vld [vmem:[%s1 + $0xc] sm:$0xf]
    %v48 = vld [vmem:[%s2] sm:$0x1]
    %v50 = vlaneseq
    %v51 = vshrl.u32 %v50, 7
    %v52 = vsub.s32 0, %v51
    %v53 = vrot.slane %v48, %v52
    %v59 = vunpack.c.l.b16 %v44
    %v60 = vunpack.c.l.b16 %v45
    %v61 = vunpack.c.l.b16 %v46
    %v62 = vunpack.c.l.b16 %v47
    %v63 = vpack.c.b16 %v60, %v59
    %v64 = vpack.c.b16 %v62, %v61
    %vm67 = vcmask 261120
    %v69 = vsel %vm67, %v43, 0
    %71 = vmatprep.subr.bf16.mxu0 0
    %72 = vmatpush1.bf16.msra.mxu0 %v63
    %73 = vmatprep.subr.bf16.mxu0 0
    %74 = vmatpush1.bf16.msra.mxu0 %v64
    %75 = vmatprep.subr.bf16.mxu0 0
    %76 = vmatpush1.bf16.msra.mxu0 0
    %77 = vmatprep.subr.bf16.mxu0 0
    %78 = vmatpush1.bf16.msra.mxu0 0
    %79 = vmatprep.subr.bf16.mxu0 0
    %80 = vmatpush1.bf16.msra.mxu0 0
    %81 = vmatprep.subr.bf16.mxu0 0
    %82 = vmatpush1.bf16.msra.mxu0 0
    %83 = vmatprep.subr.bf16.mxu0 0
    %84 = vmatpush1.bf16.msra.mxu0 0
    %85 = vmatprep.subr.bf16.mxu0 0
    %86 = vmatpush1.bf16.msra.mxu0 0
    %87 = vmatprep.subr.bf16.mxu0 0
    %88 = vmatpush1.bf16.msra.mxu0 0
    %89 = vmatprep.subr.bf16.mxu0 0
    %90 = vmatpush1.bf16.msra.mxu0 0
    %91 = vmatprep.subr.bf16.mxu0 0
    %92 = vmatpush1.bf16.msra.mxu0 0
    %93 = vmatprep.subr.bf16.mxu0 0
    %94 = vmatpush1.bf16.msra.mxu0 0
    %95 = vmatprep.subr.bf16.mxu0 0
    %96 = vmatpush1.bf16.msra.mxu0 0
    %97 = vmatprep.subr.bf16.mxu0 0
    %98 = vmatpush1.bf16.msra.mxu0 0
    %99 = vmatprep.subr.bf16.mxu0 0
    %100 = vmatpush1.bf16.msra.mxu0 0
    %101 = vmatprep.subr.bf16.mxu0 0
    %102 = vmatpush1.bf16.msra.mxu0 0
    %103 = vmatprep.mubr.bf16.mxu0 0
    %104 = vmatmul.mubr.bf16.gmra.mrb[0].mxu0 %v69
    %v105 = vpop.f32.mrb[0].mxu0
    %v106 = vadd.f32 %v53, %v105
    %v107 = vpop.f32.mrb[0].mxu0
    %v108 = vpop.f32.mrb[0].mxu0
    %v109 = vpop.f32.mrb[0].mxu0
    %110 = vdwg.mxu0
    %v111 = vmax.f32 %v106, 0.0
    %v112 = vpack.c.bf16 %v111, %v111
    %v113 = vld [vmem:[#allocation3] sm:$0xf]
    %v114 = vld [vmem:[#allocation3 + $0x4] sm:$0xf]
    %v115 = vld [vmem:[#allocation3 + $0x8] sm:$0xf]
    %v116 = vld [vmem:[#allocation3 + $0xc] sm:$0xf]
    %v117 = vld [vmem:[#allocation3 + $0x10] sm:$0xf]
    %v118 = vld [vmem:[#allocation3 + $0x14] sm:$0xf]
    %v119 = vld [vmem:[#allocation3 + $0x18] sm:$0xf]
    %v120 = vld [vmem:[#allocation3 + $0x1c] sm:$0xf]
    %v121 = vld [vmem:[#allocation3 + $0x20] sm:$0xf]
    %v122 = vld [vmem:[#allocation3 + $0x24] sm:$0xf]
    %v123 = vld [vmem:[#allocation3 + $0x28] sm:$0xf]
    %v124 = vld [vmem:[#allocation3 + $0x2c] sm:$0xf]
    %v125 = vld [vmem:[#allocation3 + $0x30] sm:$0xf]
    %v126 = vld [vmem:[#allocation3 + $0x34] sm:$0xf]
    %v127 = vld [vmem:[#allocation3 + $0x38] sm:$0xf]
    %v128 = vld [vmem:[#allocation3 + $0x3c] sm:$0xf]
    %v129 = vld [vmem:[%s4] sm:$0x1]
    %v131 = vlaneseq
    %v132 = vshrl.u32 %v131, 7
    %v133 = vsub.s32 0, %v132
    %v134 = vrot.slane %v129, %v133
    %v152 = vunpack.c.l.b16 %v113
    %v153 = vunpack.c.l.b16 %v114
    %v154 = vunpack.c.l.b16 %v115
    %v155 = vunpack.c.l.b16 %v116
    %v156 = vunpack.c.l.b16 %v117
    %v157 = vunpack.c.l.b16 %v118
    %v158 = vunpack.c.l.b16 %v119
    %v159 = vunpack.c.l.b16 %v120
    %v160 = vunpack.c.l.b16 %v121
    %v161 = vunpack.c.l.b16 %v122
    %v162 = vunpack.c.l.b16 %v123
    %v163 = vunpack.c.l.b16 %v124
    %v164 = vunpack.c.l.b16 %v125
    %v165 = vunpack.c.l.b16 %v126
    %v166 = vunpack.c.l.b16 %v127
    %v167 = vunpack.c.l.b16 %v128
    %v168 = vpack.c.b16 %v153, %v152
    %v169 = vpack.c.b16 %v155, %v154
    %v170 = vpack.c.b16 %v157, %v156
    %v171 = vpack.c.b16 %v159, %v158
    %v172 = vpack.c.b16 %v161, %v160
    %v173 = vpack.c.b16 %v163, %v162
    %v174 = vpack.c.b16 %v165, %v164
    %v175 = vpack.c.b16 %v167, %v166
    %184 = vmatprep.subr.bf16.mxu0 0
    %185 = vmatpush1.bf16.msra.mxu0 %v168
    %186 = vmatprep.subr.bf16.mxu0 0
    %187 = vmatpush1.bf16.msra.mxu0 %v169
    %188 = vmatprep.subr.bf16.mxu0 0
    %189 = vmatpush1.bf16.msra.mxu0 %v170
    %190 = vmatprep.subr.bf16.mxu0 0
    %191 = vmatpush1.bf16.msra.mxu0 %v171
    %192 = vmatprep.subr.bf16.mxu0 0
    %193 = vmatpush1.bf16.msra.mxu0 %v172
    %194 = vmatprep.subr.bf16.mxu0 0
    %195 = vmatpush1.bf16.msra.mxu0 %v173
    %196 = vmatprep.subr.bf16.mxu0 0
    %197 = vmatpush1.bf16.msra.mxu0 %v174
    %198 = vmatprep.subr.bf16.mxu0 0
    %199 = vmatpush1.bf16.msra.mxu0 %v175
    %200 = vmatprep.subr.bf16.mxu0 0
    %201 = vmatpush1.bf16.msra.mxu0 0
    %202 = vmatprep.subr.bf16.mxu0 0
    %203 = vmatpush1.bf16.msra.mxu0 0
    %204 = vmatprep.subr.bf16.mxu0 0
    %205 = vmatpush1.bf16.msra.mxu0 0
    %206 = vmatprep.subr.bf16.mxu0 0
    %207 = vmatpush1.bf16.msra.mxu0 0
    %208 = vmatprep.subr.bf16.mxu0 0
    %209 = vmatpush1.bf16.msra.mxu0 0
    %210 = vmatprep.subr.bf16.mxu0 0
    %211 = vmatpush1.bf16.msra.mxu0 0
    %212 = vmatprep.subr.bf16.mxu0 0
    %213 = vmatpush1.bf16.msra.mxu0 0
    %214 = vmatprep.subr.bf16.mxu0 0
    %215 = vmatpush1.bf16.msra.mxu0 0
    %216 = vmatprep.mubr.bf16.mxu0 0
    %217 = vmatmul.mubr.bf16.gmra.mrb[0].mxu0 %v112
    %v218 = vpop.f32.mrb[0].mxu0
    %v219 = vadd.f32 %v134, %v218
    %v220 = vpop.f32.mrb[0].mxu0
    %v221 = vpop.f32.mrb[0].mxu0
    %v222 = vpop.f32.mrb[0].mxu0
    %223 = vdwg.mxu0
    %v224 = vmax.f32 %v219, 0.0
    %v225 = vld [vmem:[%s5] sm:$0x1]
    %v227 = vlaneseq
    %v228 = vshrl.u32 %v227, 7
    %v229 = vsub.s32 0, %v228
    %v230 = vrot.slane %v225, %v229
    %v232 = vmul.f32 %v224, %v230
    %233 = vadd.xlane.f32.xlu0 %v232
    %v234 = vpop.xlane.xlu0 %233
    %s235 = sld [smem:[#allocation2]]
    %v236 = vstv %s235
    %v237 = vadd.f32 %v234, %v236
    %v239 = vlaneseq
    %v240 = vand.u32 %v239, 127
    %v241 = vlaneseq
    %v242 = vshrl.u32 %v241, 7
    %v243 = vsub.s32 %v240, %v242
    %v244 = vrot.slane %v237, %v243
    %vm246 = vcmask 57344
    %247 = vst.msk [vmem:[#allocation6] sm:$0x1] %vm246, %v244
    // Predicated region
    $region34: #{ffn_forward.1} parent=1 // pred_check
      _
    $region35: #{ffn_forward.1} parent=1 // pred_check_branch
      %249 = sbr.rel (0) target = $region37
    $region36: #{ffn_forward.1} parent=1 // pred_region
      %s251 = ssub.s32 16, 16
      %252 = vsyncadd [#allocation5], %s251
      %s254 = sshll.u32 [#allocation6], 4
      %s255 = int_to_ptr.vmem [resolvable:$true] %s254
      %257 = dma.vmem_to_hbm [thread:$0]  %s255, 16, %s7, [#allocation5]
    $region37: #{ffn_forward.1} parent=1 // pred_fallthru
      _
    // Predicated region
    $region38: #{ffn_forward.1} parent=1 // pred_check
      _
    $region39: #{ffn_forward.1} parent=1 // pred_check_branch
      %259 = sbr.rel (0) target = $region41
    $region40: #{ffn_forward.1} parent=1 // pred_region
      %260 = dma.done [#allocation5], 16
    $region41: #{ffn_forward.1} parent=1 // pred_fallthru
      _
    %261 = vsyncpa [#allocation4], 1
    %262 = vsyncpa [#allocation5], 1

</llo_original>
